<compile_context>
chip_gen: v6e
topology: v6e:2x2x1
jax: 0.10.0
libtpu: 0.0.40
codegen_flags: <defaults>
</compile_context>

<pallas_src>
import jax
import jax.numpy as jnp
from jax.experimental import pallas as pl
from jax.experimental.pallas import tpu as pltpu


def _sobelxy_kernel(x_ref, o_ref, xp_ref):
    # x_ref: (TB, H, W) input dtype; o_ref: (TB, H, W) f32;
    # xp_ref: (TB, H+2, W+2) f32 VMEM halo scratch.
    tb, hp2, wp2 = xp_ref.shape
    h = hp2 - 2
    w = wp2 - 2

    # In-kernel upcast (input may be bf16 over HBM; compute stays f32 = parity).
    x = x_ref[...].astype(jnp.float32)

    # Build the zero-padded tile: zero ONLY the four halo edges (thin masked
    # stores), then overwrite the interior.  This is the F.conv2d(padding=1)
    # zero-extension without a full-block zero-fill pass.
    xp_ref[:, 0:1, :] = jnp.zeros((tb, 1, wp2), jnp.float32)
    xp_ref[:, h + 1:h + 2, :] = jnp.zeros((tb, 1, wp2), jnp.float32)
    xp_ref[:, :, 0:1] = jnp.zeros((tb, hp2, 1), jnp.float32)
    xp_ref[:, :, w + 1:w + 2] = jnp.zeros((tb, hp2, 1), jnp.float32)
    xp_ref[:, 1:h + 1, 1:w + 1] = x
    xp = xp_ref[...]                                  # (TB, H+2, W+2)

    # Separable stencil: one vertical 3-tap smooth + one vertical diff
    # (sublane-offset slices), then +/-1 lane-offset slices of those two.
    r0 = xp[:, 0:h, :]           # rows i-1          (TB, H, W+2)
    r1 = xp[:, 1:h + 1, :]       # rows i
    r2 = xp[:, 2:h + 2, :]       # rows i+1
    v = r0 + 2.0 * r1 + r2       # -> sobel-x after horizontal diff
    d = r0 - r2                  # -> sobel-y after horizontal smooth

    # kernelx = [[-1,0,1],[-2,0,2],[-1,0,1]]  ->  v[:, j+1] - v[:, j-1]
    sobelx = v[:, :, 2:w + 2] - v[:, :, 0:w]
    # kernely = [[1,2,1],[0,0,0],[-1,-2,-1]]  ->  d[:, j-1] + 2 d[:, j] + d[:, j+1]
    sobely = d[:, :, 0:w] + 2.0 * d[:, :, 1:w + 1] + d[:, :, 2:w + 2]

    o_ref[...] = (jnp.abs(sobelx) + jnp.abs(sobely)).astype(o_ref.dtype)


def sobelxy(x, *, vmem_budget_bytes=20 << 20, min_grid_steps=4):
    """x: (b, c, h, w) float/bfloat -> (b, c, h, w) float32 (matches PyTorch Sobelxy)."""
    b, c, h, w = x.shape
    n = b * c
    in_bytes = x.dtype.itemsize

    # Per-plane VMEM cost of one pipelined grid step:
    #   2x input (double-buffered, input dtype) + 2x output (double-buffered f32)
    #   + 1x (h+2, w+2) f32 halo scratch.
    per_plane = (2 * h * w * in_bytes) + (2 * h * w * 4) + ((h + 2) * (w + 2) * 4)

    # As many planes per step as the VMEM budget allows ...
    tb = max(1, min(n, vmem_budget_bytes // max(per_plane, 1)))
    # ... but keep at least `min_grid_steps` grid steps so the DMA pipeline
    # overlaps and v7x's two TensorCores (dimension_semantics="parallel")
    # both get work.
    tb = max(1, min(tb, pl.cdiv(n, min_grid_steps)))

    # Pad n up to a multiple of tb (zero planes, dropped afterwards) instead of
    # shrinking tb for awkward b*c counts (prime counts etc.).
    n_pad = pl.cdiv(n, tb) * tb
    xr = x.reshape(n, h, w)                     # NO dtype cast here (bf16 stays bf16)
    if n_pad != n:
        xr = jnp.concatenate(
            [xr, jnp.zeros((n_pad - n, h, w), x.dtype)], axis=0)

    out = pl.pallas_call(
        _sobelxy_kernel,
        out_shape=jax.ShapeDtypeStruct((n_pad, h, w), jnp.float32),
        grid=(n_pad // tb,),
        in_specs=[pl.BlockSpec((tb, h, w), lambda i: (i, 0, 0))],
        out_specs=pl.BlockSpec((tb, h, w), lambda i: (i, 0, 0)),
        scratch_shapes=[pltpu.VMEM((tb, h + 2, w + 2), jnp.float32)],
        compiler_params=pltpu.CompilerParams(
            dimension_semantics=("parallel",),
            vmem_limit_bytes=32 * 1024 * 1024),
    )(xr)

    return out[:n].reshape(b, c, h, w)


def _sobelxy_ref(x):
    """Pure-JAX reference (same math as the PyTorch module)."""
    kx = jnp.array([[-1.0, 0.0, 1.0], [-2.0, 0.0, 2.0], [-1.0, 0.0, 1.0]],
                   dtype=jnp.float32)
    ky = jnp.array([[1.0, 2.0, 1.0], [0.0, 0.0, 0.0], [-1.0, -2.0, -1.0]],
                   dtype=jnp.float32)
    b, c, h, w = x.shape
    xr = x.reshape(b * c, 1, h, w).astype(jnp.float32)
    convx = jax.lax.conv_general_dilated(
        xr, kx[None, None], (1, 1), ((1, 1), (1, 1)),
        dimension_numbers=("NCHW", "OIHW", "NCHW"))
    convy = jax.lax.conv_general_dilated(
        xr, ky[None, None], (1, 1), ((1, 1), (1, 1)),
        dimension_numbers=("NCHW", "OIHW", "NCHW"))
    return (jnp.abs(convx) + jnp.abs(convy)).reshape(b, c, h, w)


if __name__ == "__main__":
    key = jax.random.PRNGKey(0)
    x = jax.random.normal(key, (2, 4, 16, 16), dtype=jnp.float32)

    out = sobelxy(x)
    jax.block_until_ready(out)

    ref = _sobelxy_ref(x)
    assert out.shape == (2, 4, 16, 16)
    assert out.dtype == jnp.float32
    assert jnp.allclose(out, ref, atol=1e-5, rtol=1e-5)

    print("KERNEL_OK")
</pallas_src>

<mosaic_0001>
module attributes {stable_mosaic.version = 11 : i64} {
  func.func @_sobelxy_kernel(%arg0: i32, %arg1: memref<2x16x16xf32, #tpu.memory_space<vmem>>, %arg2: memref<2x16x16xf32, #tpu.memory_space<vmem>>, %arg3: memref<2x18x18xf32, #tpu.memory_space<vmem>>) attributes {dimension_semantics = [#tpu.dimension_semantics<parallel>], iteration_bounds = array<i64: 4>, scalar_prefetch = 0 : i64, scratch_operands = 1 : i64, tpu.core_type = #tpu.core_type<tc>, window_params = [{transform_indices = @transform_0, window_bounds = array<i64: 2, 16, 16>}, {transform_indices = @transform_1, window_bounds = array<i64: 2, 16, 16>}]} {
    %c0 = arith.constant 0 : index
    %c0_0 = arith.constant 0 : index
    %c0_1 = arith.constant 0 : index
    %0 = vector.load %arg1[%c0, %c0_0, %c0_1] : memref<2x16x16xf32, #tpu.memory_space<vmem>>, vector<2x16x16xf32>
    %cst = arith.constant 0.000000e+00 : f32
    %1 = vector.broadcast %cst : f32 to vector<2x1x18xf32>
    %c0_2 = arith.constant 0 : index
    %c0_3 = arith.constant 0 : index
    %c0_4 = arith.constant 0 : index
    %2 = vector.load %arg3[%c0_2, %c0_3, %c0_4] : memref<2x18x18xf32, #tpu.memory_space<vmem>>, vector<2x1x18xf32>
    tpu.vector_store %arg3[%c0_2, %c0_3, %c0_4], %1 {strides = array<i32>} : memref<2x18x18xf32, #tpu.memory_space<vmem>>, vector<2x1x18xf32>,
    %cst_5 = arith.constant 0.000000e+00 : f32
    %3 = vector.broadcast %cst_5 : f32 to vector<2x1x18xf32>
    %c0_6 = arith.constant 0 : index
    %c17 = arith.constant 17 : index
    %c0_7 = arith.constant 0 : index
    %4 = vector.load %arg3[%c0_6, %c17, %c0_7] : memref<2x18x18xf32, #tpu.memory_space<vmem>>, vector<2x1x18xf32>
    tpu.vector_store %arg3[%c0_6, %c17, %c0_7], %3 {strides = array<i32>} : memref<2x18x18xf32, #tpu.memory_space<vmem>>, vector<2x1x18xf32>,
    %cst_8 = arith.constant 0.000000e+00 : f32
    %5 = vector.broadcast %cst_8 : f32 to vector<2x18x1xf32>
    %c0_9 = arith.constant 0 : index
    %c0_10 = arith.constant 0 : index
    %c0_11 = arith.constant 0 : index
    %6 = vector.load %arg3[%c0_9, %c0_10, %c0_11] : memref<2x18x18xf32, #tpu.memory_space<vmem>>, vector<2x18x1xf32>
    tpu.vector_store %arg3[%c0_9, %c0_10, %c0_11], %5 {strides = array<i32>} : memref<2x18x18xf32, #tpu.memory_space<vmem>>, vector<2x18x1xf32>,
    %cst_12 = arith.constant 0.000000e+00 : f32
    %7 = vector.broadcast %cst_12 : f32 to vector<2x18x1xf32>
    %c0_13 = arith.constant 0 : index
    %c0_14 = arith.constant 0 : index
    %c17_15 = arith.constant 17 : index
    %8 = vector.load %arg3[%c0_13, %c0_14, %c17_15] : memref<2x18x18xf32, #tpu.memory_space<vmem>>, vector<2x18x1xf32>
    tpu.vector_store %arg3[%c0_13, %c0_14, %c17_15], %7 {strides = array<i32>} : memref<2x18x18xf32, #tpu.memory_space<vmem>>, vector<2x18x1xf32>,
    %c0_16 = arith.constant 0 : index
    %c1 = arith.constant 1 : index
    %c1_17 = arith.constant 1 : index
    %9 = vector.load %arg3[%c0_16, %c1, %c1_17] : memref<2x18x18xf32, #tpu.memory_space<vmem>>, vector<2x16x16xf32>
    tpu.vector_store %arg3[%c0_16, %c1, %c1_17], %0 {strides = array<i32>} : memref<2x18x18xf32, #tpu.memory_space<vmem>>, vector<2x16x16xf32>,
    %c0_18 = arith.constant 0 : index
    %c0_19 = arith.constant 0 : index
    %c0_20 = arith.constant 0 : index
    %10 = vector.load %arg3[%c0_18, %c0_19, %c0_20] : memref<2x18x18xf32, #tpu.memory_space<vmem>>, vector<2x18x18xf32>
    %11 = vector.extract_strided_slice %10 {offsets = [0, 0, 0], sizes = [2, 16, 18], strides = [1, 1, 1]} : vector<2x18x18xf32> to vector<2x16x18xf32>
    %12 = vector.extract_strided_slice %10 {offsets = [0, 1, 0], sizes = [2, 16, 18], strides = [1, 1, 1]} : vector<2x18x18xf32> to vector<2x16x18xf32>
    %13 = vector.extract_strided_slice %10 {offsets = [0, 2, 0], sizes = [2, 16, 18], strides = [1, 1, 1]} : vector<2x18x18xf32> to vector<2x16x18xf32>
    %cst_21 = arith.constant 2.000000e+00 : f32
    %14 = vector.broadcast %cst_21 : f32 to vector<2x16x18xf32>
    %15 = arith.mulf %14, %12 : vector<2x16x18xf32>
    %16 = arith.addf %11, %15 : vector<2x16x18xf32>
    %17 = arith.addf %16, %13 : vector<2x16x18xf32>
    %18 = arith.subf %11, %13 : vector<2x16x18xf32>
    %19 = vector.extract_strided_slice %17 {offsets = [0, 0, 2], sizes = [2, 16, 16], strides = [1, 1, 1]} : vector<2x16x18xf32> to vector<2x16x16xf32>
    %20 = vector.extract_strided_slice %17 {offsets = [0, 0, 0], sizes = [2, 16, 16], strides = [1, 1, 1]} : vector<2x16x18xf32> to vector<2x16x16xf32>
    %21 = arith.subf %19, %20 : vector<2x16x16xf32>
    %22 = vector.extract_strided_slice %18 {offsets = [0, 0, 0], sizes = [2, 16, 16], strides = [1, 1, 1]} : vector<2x16x18xf32> to vector<2x16x16xf32>
    %23 = vector.extract_strided_slice %18 {offsets = [0, 0, 1], sizes = [2, 16, 16], strides = [1, 1, 1]} : vector<2x16x18xf32> to vector<2x16x16xf32>
    %cst_22 = arith.constant 2.000000e+00 : f32
    %24 = vector.broadcast %cst_22 : f32 to vector<2x16x16xf32>
    %25 = arith.mulf %24, %23 : vector<2x16x16xf32>
    %26 = arith.addf %22, %25 : vector<2x16x16xf32>
    %27 = vector.extract_strided_slice %18 {offsets = [0, 0, 2], sizes = [2, 16, 16], strides = [1, 1, 1]} : vector<2x16x18xf32> to vector<2x16x16xf32>
    %28 = arith.addf %26, %27 : vector<2x16x16xf32>
    %29 = math.absf %21 : vector<2x16x16xf32>
    %30 = math.absf %28 : vector<2x16x16xf32>
    %31 = arith.addf %29, %30 : vector<2x16x16xf32>
    %c0_23 = arith.constant 0 : index
    %c0_24 = arith.constant 0 : index
    %c0_25 = arith.constant 0 : index
    %32 = vector.load %arg2[%c0_23, %c0_24, %c0_25] : memref<2x16x16xf32, #tpu.memory_space<vmem>>, vector<2x16x16xf32>
    tpu.vector_store %arg2[%c0_23, %c0_24, %c0_25], %31 {strides = array<i32>} : memref<2x16x16xf32, #tpu.memory_space<vmem>>, vector<2x16x16xf32>,
    return
  }
  func.func @transform_0(%arg0: i32) -> (i32, i32, i32) {
    %c0_i32 = arith.constant 0 : i32
    %c0_i32_0 = arith.constant 0 : i32
    %c0_i32_1 = arith.constant 0 : i32
    return %arg0, %c0_i32, %c0_i32_0 : i32, i32, i32
  }
  func.func @transform_1(%arg0: i32) -> (i32, i32, i32) {
    %c0_i32 = arith.constant 0 : i32
    %c0_i32_0 = arith.constant 0 : i32
    %c0_i32_1 = arith.constant 0 : i32
    return %arg0, %c0_i32, %c0_i32_0 : i32, i32, i32
  }
}

</mosaic_0001>

<llo_original>
// kernel: tpu_custom_call.1
$region0: #{tpu_custom_call.1}
  #allocation0 [shape = 'u32[]', space=smem, size = 0x4, offset = 0x4, fixed_abs, tag = 'smem constant byte address 0x4 - core index']
  #allocation1 [shape = 'u32[144,128]{1,0:T(1,128)}', space=vmem, size = 0x12000, scoped, tag = 'internal scratch']
  #allocation2 [shape = 'f32[2,18,18]{2,1,0:T(8,128)}', space=vmem, size = 0x6000, scoped, tag = 'scratch operand']
  %s0 = inlined_call_operand.hbm [shape: f32[8,16,16], index: 0, kind: input, shape index: {}]
  %s1 = inlined_call_operand.hbm [shape: f32[8,16,16], index: 1, kind: output, shape index: {}]
  %s2 = sld [smem:[#allocation0]]
  $region41: #{tpu_custom_call.1} parent=0
    _
  %s4 = ssub.s32 1, %s2
  %s5 = scalar_select 0, %s4, %s2
  $region1: #{tpu_custom_call.1} parent=0
    #allocation3 [shape = 'u8[32768]{0}', space=vmem, size = 0x8000, scoped, tag = 'input window, operand 0']
    #allocation4 [shape = 's32[2]{0}', space=sflag, size = 0x8, scoped, tag = 'scoped memory for tpu_custom_call.1']
    #allocation5 [shape = 's32[2]{0}', space=sflag, size = 0x8, scoped, tag = 'scoped memory for tpu_custom_call.1']
    #allocation6 [shape = 'u8[32768]{0}', space=vmem, size = 0x8000, scoped, tag = 'output window, operand 0']
    %6 = vsyncpa [#allocation4], 0
    %s7 = scalar_lea.sflag [#allocation4], 1
    %8 = vsyncpa %s7, 0
    %9 = vsyncpa [#allocation5], 0
    %s10 = scalar_lea.sflag [#allocation5], 1
    %11 = vsyncpa %s10, 0
    loop: start=0, step=1, limit=6
    $region2: #{tpu_custom_call.1} parent=1 // loop_pre_header
      _
    $region3: #{tpu_custom_call.1} parent=1 // loop_header
      %s13 = sphi 0, %s17
      %p14 = scmp.ge.s32.totalorder %s13, 6
      %s23 = sphi 0, %s25
      %s26 = sphi 0, %s23
      %s27 = sphi 0, %s26
      %s43 = sphi 0, %s27
      %s49 = sphi 0, %s51
      %s52 = sphi 0, %s49
      %s53 = sphi 0, %s52
      %s69 = sphi 0, %s53
    $region4: #{tpu_custom_call.1} parent=1 // loop_header_branch
      %16 = sbr.rel (%p14) target = $region8
    $region5: #{tpu_custom_call.1} parent=1 // loop_body
      %s18 = ssub.s32 %s13, 1
      %s19 = ssub.s32 %s13, 2
      %s20 = sadd.s32 %s13, 1
      %s21 = ssub.s32 %s13, %s20
      %p22 = scmp.eq.s32.totalorder %s21, 0
      %s24 = sadd.s32 %s23, 1
      %s25 = scalar_select %p22, %s23, %s24
      %p28 = pneg %p22
      %p29 = scmp.eq.s32.totalorder %s13, 3
      %p30 = por %p28, %p29
      %p31 = scmp.ne.s32.totalorder %s23, %s26
      %p32 = scmp.eq.s32.totalorder %s13, 0
      %p33 = por %p31, %p32
      %p34 = scmp.ne.s32.totalorder %s23, %s26
      %p35 = scmp.eq.s32.totalorder %s18, 3
      %p36 = por %p34, %p35
      %p37 = scmp.ne.s32.totalorder %s26, %s27
      %p38 = scmp.eq.s32.totalorder %s18, 0
      %p39 = por %p37, %p38
      %p40 = scmp.ne.s32.totalorder %s26, %s27
      %p41 = scmp.eq.s32.totalorder %s19, 3
      %p42 = por %p40, %p41
      %p44 = scmp.ne.s32.totalorder %s27, %s43
      %p45 = scmp.eq.s32.totalorder %s19, 0
      %p46 = por %p44, %p45
      %s47 = ssub.s32 %s13, %s20
      %p48 = scmp.eq.s32.totalorder %s47, 0
      %s50 = sadd.s32 %s49, 1
      %s51 = scalar_select %p48, %s49, %s50
      %p54 = pneg %p48
      %p55 = scmp.eq.s32.totalorder %s13, 3
      %p56 = por %p54, %p55
      %p57 = scmp.ne.s32.totalorder %s49, %s52
      %p58 = scmp.eq.s32.totalorder %s13, 0
      %p59 = por %p57, %p58
      %p60 = scmp.ne.s32.totalorder %s49, %s52
      %p61 = scmp.eq.s32.totalorder %s18, 3
      %p62 = por %p60, %p61
      %p63 = scmp.ne.s32.totalorder %s52, %s53
      %p64 = scmp.eq.s32.totalorder %s18, 0
      %p65 = por %p63, %p64
      %p66 = scmp.ne.s32.totalorder %s52, %s53
      %p67 = scmp.eq.s32.totalorder %s19, 3
      %p68 = por %p66, %p67
      %p70 = scmp.ne.s32.totalorder %s53, %s69
      %p71 = scmp.eq.s32.totalorder %s19, 0
      %p72 = por %p70, %p71
      %p73 = scmp.le.s32.totalorder 1, %s13
      %p74 = scmp.lt.s32.totalorder %s13, 5
      %p75 = pnand %p73, %p74
      %p76 = pneg %p75
      // Predicated region
      $region9: #{tpu_custom_call.1} parent=5 // pred_check
        _
      $region10: #{tpu_custom_call.1} parent=5 // pred_check_branch
        %78 = sbr.rel (%p75) target = $region12
      $region11: #{tpu_custom_call.1} parent=5 // pred_region
        %s79 = ssub.s32 %s13, 1
      $region12: #{tpu_custom_call.1} parent=5 // pred_fallthru
        _
      %p80 = scmp.lt.s32.totalorder %s13, 4
      // Predicated region
      $region13: #{tpu_custom_call.1} parent=5 // pred_check
        %p81 = pneg %p80
      $region14: #{tpu_custom_call.1} parent=5 // pred_check_branch
        %83 = sbr.rel (%p81) target = $region16
      $region15: #{tpu_custom_call.1} parent=5 // pred_region
        // Predicated region
        $region17: #{tpu_custom_call.1} parent=15 // pred_check
          %p84 = pneg %p33
        $region18: #{tpu_custom_call.1} parent=15 // pred_check_branch
          %86 = sbr.rel (%p84) target = $region20
        $region19: #{tpu_custom_call.1} parent=15 // pred_region
          %s87 = sand.u32 %s23, 1
          %s88 = scalar_lea.sflag [#allocation4], %s87
          %s89 = sand.u32 %s23, 1
          %s90 = smul.addr %s89, 32
          %s91 = scalar_lea.vmem [#allocation3], %s90
          %s92 = smul.u32 2, %s13
          %s94 = ssub.s32 512, 512
          %95 = vsyncadd %s88, %s94
          %s96 = smul.addr %s92, 2
          %s97 = smul.addr %s96, 128
          %s98 = scalar_lea.hbm %s0, %s97
          %s99 = sshll.u32 %s91, 4
          %s100 = int_to_ptr.vmem [resolvable:$true] %s99
          %105 = dma.hbm_to_vmem [thread:$0]  %s98, 512, %s100, %s88, 128, 128, 8
        $region20: #{tpu_custom_call.1} parent=15 // pred_fallthru
          _
      $region16: #{tpu_custom_call.1} parent=5 // pred_fallthru
        _
      %p106 = scmp.le.s32.totalorder 1, %s13
      %p107 = scmp.lt.s32.totalorder %s13, 5
      %p108 = pnand %p106, %p107
      %p109 = pneg %p108
      // Predicated region
      $region21: #{tpu_custom_call.1} parent=5 // pred_check
        _
      $region22: #{tpu_custom_call.1} parent=5 // pred_check_branch
        %111 = sbr.rel (%p108) target = $region24
      $region23: #{tpu_custom_call.1} parent=5 // pred_region
        %s112 = ssub.s32 %s13, 1
        %s113 = sand.u32 %s26, 1
        %s114 = scalar_lea.sflag [#allocation4], %s113
        %s115 = sand.u32 %s26, 1
        %s116 = smul.addr %s115, 32
        %s117 = scalar_lea.vmem [#allocation3], %s116
        // Predicated region
        $region25: #{tpu_custom_call.1} parent=23 // pred_check
          %p118 = pneg %p39
        $region26: #{tpu_custom_call.1} parent=23 // pred_check_branch
          %120 = sbr.rel (%p118) target = $region28
        $region27: #{tpu_custom_call.1} parent=23 // pred_region
          %121 = dma.done %s114, 512
        $region28: #{tpu_custom_call.1} parent=23 // pred_fallthru
          _
        %s122 = sand.u32 %s26, 1
        %s123 = scalar_lea.sflag [#allocation4], %s122
        %s124 = sand.u32 %s26, 1
        %s125 = smul.addr %s124, 32
        %s126 = scalar_lea.vmem [#allocation3], %s125
        %p127 = pneg %p39
        %p128 = pneg %p36
        %p129 = pneg %p65
        %p130 = pneg %p62
        %s131 = sand.u32 %s52, 1
        %s132 = scalar_lea.sflag [#allocation5], %s131
        %s133 = sand.u32 %s52, 1
        %s134 = smul.addr %s133, 32
        %s135 = scalar_lea.vmem [#allocation6], %s134
        %s136 = smul.u32 2, %s18
        %s137 = smul.u32 2, %s18
        %v138 = vld [vmem:[%s117] sm:$0xff]
        %v139 = vld [vmem:[%s117 + $0x8] sm:$0xff]
        %v140 = vld [vmem:[%s117 + $0x10] sm:$0xff]
        %v141 = vld [vmem:[%s117 + $0x18] sm:$0xff]
        %vm142 = vcmask 139264
        %143 = vst.msk [vmem:[#allocation2] sm:$0x1] %vm142, 0.0
        %144 = vst.msk [vmem:[#allocation2 + $0x18] sm:$0x1] %vm142, 0.0
        %145 = vst.msk [vmem:[#allocation2 + $0x11] sm:$0x1] %vm142, 0.0
        %146 = vst.msk [vmem:[#allocation2 + $0x29] sm:$0x1] %vm142, 0.0
        %vm147 = vcmask 7168
        %148 = vst.msk [vmem:[#allocation2] sm:$0xff] %vm147, 0.0
        %149 = vst.msk [vmem:[#allocation2 + $0x8] sm:$0xff] %vm147, 0.0
        %vm150 = vcmask 1024
        %151 = vst.msk [vmem:[#allocation2 + $0x10] sm:$0x3] %vm150, 0.0
        %152 = vst.msk [vmem:[#allocation2 + $0x18] sm:$0xff] %vm147, 0.0
        %153 = vst.msk [vmem:[#allocation2 + $0x20] sm:$0xff] %vm147, 0.0
        %154 = vst.msk [vmem:[#allocation2 + $0x28] sm:$0x3] %vm150, 0.0
        %vm155 = vcmask 146568
        %156 = vst.msk [vmem:[#allocation2] sm:$0xff] %vm155, 0.0
        %157 = vst.msk [vmem:[#allocation2 + $0x8] sm:$0xff] %vm155, 0.0
        %vm158 = vcmask 140424
        %159 = vst.msk [vmem:[#allocation2 + $0x10] sm:$0x3] %vm158, 0.0
        %160 = vst.msk [vmem:[#allocation2 + $0x18] sm:$0xff] %vm155, 0.0
        %161 = vst.msk [vmem:[#allocation2 + $0x20] sm:$0xff] %vm155, 0.0
        %162 = vst.msk [vmem:[#allocation2 + $0x28] sm:$0x3] %vm158, 0.0
        %167 = vrot.lane.b32.xlu0 %v138, 1
        %v168 = vpop.permute.xlu0 %167
        %169 = vrot.lane.b32.xlu0 %v139, 1
        %v170 = vpop.permute.xlu0 %169
        %171 = vrot.lane.b32.xlu0 %v140, 1
        %v172 = vpop.permute.xlu0 %171
        %173 = vrot.lane.b32.xlu0 %v141, 1
        %v174 = vpop.permute.xlu0 %173
        %vm179 = vcmask 138248
        %180 = vst.msk [vmem:[#allocation2 + $0x1] sm:$0xff] %vm179, %v168
        %181 = vst.msk [vmem:[#allocation2 + $0x9] sm:$0xff] %vm179, %v170
        %182 = vst.msk [vmem:[#allocation2 + $0x19] sm:$0xff] %vm179, %v172
        %183 = vst.msk [vmem:[#allocation2 + $0x21] sm:$0xff] %vm179, %v174
        %v184 = vld [vmem:[#allocation2] sm:$0xff]
        %v185 = vld [vmem:[#allocation2 + $0x8] sm:$0xff]
        %v186 = vld [vmem:[#allocation2 + $0x10] sm:$0x3]
        %v187 = vld [vmem:[#allocation2 + $0x18] sm:$0xff]
        %v188 = vld [vmem:[#allocation2 + $0x20] sm:$0xff]
        %v189 = vld [vmem:[#allocation2 + $0x28] sm:$0x3]
        %v190 = vmul.f32 %v184, 2.0
        %v191 = vmul.f32 %v185, 2.0
        %v192 = vmul.f32 %v186, 2.0
        %v193 = vmul.f32 %v187, 2.0
        %v194 = vmul.f32 %v188, 2.0
        %v195 = vmul.f32 %v189, 2.0
        %vm202 = vcmask 1046528
        %v203 = vrot.slane %v190, 1
        %v204 = vrot.slane %v191, 1
        %v205 = vsel %vm202, %v203, %v204
        %v206 = vrot.slane %v192, 1
        %v207 = vsel %vm202, %v204, %v206
        %v208 = vrot.slane %v193, 1
        %v209 = vrot.slane %v194, 1
        %v210 = vsel %vm202, %v208, %v209
        %v211 = vrot.slane %v195, 1
        %v212 = vsel %vm202, %v209, %v211
        %v217 = vadd.f32 %v184, %v205
        %v218 = vadd.f32 %v185, %v207
        %v219 = vadd.f32 %v187, %v210
        %v220 = vadd.f32 %v188, %v212
        %vm227 = vcmask 1045504
        %v228 = vrot.slane %v184, 2
        %v229 = vrot.slane %v185, 2
        %v230 = vsel %vm227, %v228, %v229
        %v231 = vrot.slane %v186, 2
        %v232 = vsel %vm227, %v229, %v231
        %v233 = vrot.slane %v187, 2
        %v234 = vrot.slane %v188, 2
        %v235 = vsel %vm227, %v233, %v234
        %v236 = vrot.slane %v189, 2
        %v237 = vsel %vm227, %v234, %v236
        %v242 = vadd.f32 %v217, %v230
        %v243 = vadd.f32 %v218, %v232
        %v244 = vadd.f32 %v219, %v235
        %v245 = vadd.f32 %v220, %v237
        %v246 = vsub.f32 %v184, %v230
        %v247 = vsub.f32 %v185, %v232
        %v248 = vsub.f32 %v187, %v235
        %v249 = vsub.f32 %v188, %v237
        %254 = vrot.lane.b32.xlu0 %v242, 2
        %v255 = vpop.permute.xlu0 %254
        %256 = vrot.lane.b32.xlu0 %v243, 2
        %v257 = vpop.permute.xlu0 %256
        %258 = vrot.lane.b32.xlu0 %v244, 2
        %v259 = vpop.permute.xlu0 %258
        %260 = vrot.lane.b32.xlu0 %v245, 2
        %v261 = vpop.permute.xlu0 %260
        %v266 = vsub.f32 %v242, %v255
        %v267 = vsub.f32 %v243, %v257
        %v268 = vsub.f32 %v244, %v259
        %v269 = vsub.f32 %v245, %v261
        %v270 = vmul.f32 %v246, 2.0
        %v271 = vmul.f32 %v247, 2.0
        %v272 = vmul.f32 %v248, 2.0
        %v273 = vmul.f32 %v249, 2.0
        %278 = vrot.lane.b32.xlu0 %v270, 127
        %v279 = vpop.permute.xlu0 %278
        %280 = vrot.lane.b32.xlu0 %v271, 127
        %v281 = vpop.permute.xlu0 %280
        %282 = vrot.lane.b32.xlu0 %v272, 127
        %v283 = vpop.permute.xlu0 %282
        %284 = vrot.lane.b32.xlu0 %v273, 127
        %v285 = vpop.permute.xlu0 %284
        %v290 = vadd.f32 %v246, %v279
        %v291 = vadd.f32 %v247, %v281
        %v292 = vadd.f32 %v248, %v283
        %v293 = vadd.f32 %v249, %v285
        %298 = vrot.lane.b32.xlu0 %v246, 126
        %v299 = vpop.permute.xlu0 %298
        %300 = vrot.lane.b32.xlu0 %v247, 126
        %v301 = vpop.permute.xlu0 %300
        %302 = vrot.lane.b32.xlu0 %v248, 126
        %v303 = vpop.permute.xlu0 %302
        %304 = vrot.lane.b32.xlu0 %v249, 126
        %v305 = vpop.permute.xlu0 %304
        %v310 = vadd.f32 %v290, %v299
        %v311 = vadd.f32 %v291, %v301
        %v312 = vadd.f32 %v292, %v303
        %v313 = vadd.f32 %v293, %v305
        %v314 = vand.u32 2147483647, %v266
        %v315 = vand.u32 2147483647, %v267
        %v316 = vand.u32 2147483647, %v268
        %v317 = vand.u32 2147483647, %v269
        %v318 = vand.u32 2147483647, %v310
        %v319 = vand.u32 2147483647, %v311
        %v320 = vand.u32 2147483647, %v312
        %v321 = vand.u32 2147483647, %v313
        %326 = vrot.lane.b32.xlu0 %v318, 2
        %v327 = vpop.permute.xlu0 %326
        %328 = vrot.lane.b32.xlu0 %v319, 2
        %v329 = vpop.permute.xlu0 %328
        %330 = vrot.lane.b32.xlu0 %v320, 2
        %v331 = vpop.permute.xlu0 %330
        %332 = vrot.lane.b32.xlu0 %v321, 2
        %v333 = vpop.permute.xlu0 %332
        %v338 = vadd.f32 %v314, %v327
        %v339 = vadd.f32 %v315, %v329
        %v340 = vadd.f32 %v316, %v331
        %v341 = vadd.f32 %v317, %v333
        %346 = vrot.lane.b32.xlu0 %v338, 126
        %v347 = vpop.permute.xlu0 %346
        %348 = vrot.lane.b32.xlu0 %v339, 126
        %v349 = vpop.permute.xlu0 %348
        %350 = vrot.lane.b32.xlu0 %v340, 126
        %v351 = vpop.permute.xlu0 %350
        %352 = vrot.lane.b32.xlu0 %v341, 126
        %v353 = vpop.permute.xlu0 %352
        %vm358 = vcmask 130048
        %359 = vst.msk [vmem:[%s135] sm:$0xff] %vm358, %v347
        %360 = vst.msk [vmem:[%s135 + $0x8] sm:$0xff] %vm358, %v349
        %361 = vst.msk [vmem:[%s135 + $0x10] sm:$0xff] %vm358, %v351
        %362 = vst.msk [vmem:[%s135 + $0x18] sm:$0xff] %vm358, %v353
        %s363 = sand.u32 %s52, 1
        %s364 = scalar_lea.sflag [#allocation5], %s363
        %s365 = sand.u32 %s52, 1
        %s366 = smul.addr %s365, 32
        %s367 = scalar_lea.vmem [#allocation6], %s366
        // Predicated region
        $region29: #{tpu_custom_call.1} parent=23 // pred_check
          %p368 = pneg %p62
        $region30: #{tpu_custom_call.1} parent=23 // pred_check_branch
          %370 = sbr.rel (%p368) target = $region32
        $region31: #{tpu_custom_call.1} parent=23 // pred_region
          %s371 = smul.u32 2, %s18
          %s373 = ssub.s32 512, 512
          %374 = vsyncadd %s364, %s373
          %s375 = smul.addr %s371, 2
          %s376 = smul.addr %s375, 128
          %s377 = scalar_lea.hbm %s1, %s376
          %s378 = sshll.u32 %s367, 4
          %s379 = int_to_ptr.vmem [resolvable:$true] %s378
          %384 = dma.vmem_to_hbm [thread:$0]  %s379, 512, %s377, %s364, 128, 128, 8
        $region32: #{tpu_custom_call.1} parent=23 // pred_fallthru
          _
      $region24: #{tpu_custom_call.1} parent=5 // pred_fallthru
        _
      %p385 = scmp.le.s32.totalorder 2, %s13
      // Predicated region
      $region33: #{tpu_custom_call.1} parent=5 // pred_check
        %p386 = pneg %p385
      $region34: #{tpu_custom_call.1} parent=5 // pred_check_branch
        %388 = sbr.rel (%p386) target = $region36
      $region35: #{tpu_custom_call.1} parent=5 // pred_region
        %s389 = ssub.s32 %s13, 2
        // Predicated region
        $region37: #{tpu_custom_call.1} parent=35 // pred_check
          %p390 = pneg %p68
        $region38: #{tpu_custom_call.1} parent=35 // pred_check_branch
          %392 = sbr.rel (%p390) target = $region40
        $region39: #{tpu_custom_call.1} parent=35 // pred_region
          %s393 = sand.u32 %s53, 1
          %s394 = scalar_lea.sflag [#allocation5], %s393
          %s395 = sand.u32 %s53, 1
          %s396 = smul.addr %s395, 32
          %s397 = scalar_lea.vmem [#allocation6], %s396
          %398 = dma.done %s394, 512
        $region40: #{tpu_custom_call.1} parent=35 // pred_fallthru
          _
      $region36: #{tpu_custom_call.1} parent=5 // pred_fallthru
        _
    $region6: #{tpu_custom_call.1} parent=1 // loop_footer
      %s17 = sadd.s32 1, %s13
    $region7: #{tpu_custom_call.1} parent=1 // loop_footer_branch
      %12 = sbr.rel target = $region3
    $region8: #{tpu_custom_call.1} parent=1 // loop_exit
      _
    %399 = vsyncpa [#allocation4], 1
    %s400 = scalar_lea.sflag [#allocation4], 1
    %401 = vsyncpa %s400, 1
    %402 = vsyncpa [#allocation5], 1
    %s403 = scalar_lea.sflag [#allocation5], 1
    %404 = vsyncpa %s403, 1

</llo_original>
